<compile_context>
chip_gen: v7x
topology: tpu7x:2x2x1
jax: 0.10.0
libtpu: 0.0.40
codegen_flags: <defaults>
</compile_context>

<pallas_src>
import functools

import jax
import jax.numpy as jnp
from jax.experimental import pallas as pl
from jax.experimental.pallas import tpu as pltpu

BN_EPS = 1e-5


def _mlp_kernel(use_bn, use_sigmoid, vec_rows, inv_n,
                x_ref, w_ref, vec_ref, out_ref):
    """Whole-MLP kernel, single invocation (no grid; batch fits VMEM).

    x_ref   : (N, F)     input, feature dim zero-padded to F = F_max
    w_ref   : (L, F, F)  per-layer weights, pre-transposed (in, out), zero-padded
    vec_ref : (R, F)     packed per-layer vectors: [gamma, beta] for BN layers,
                         [bias] for non-BN layers (bias before BN is elided)
    out_ref : (N, F)     output; the wrapper slices [:, :out_dim]
    """
    n_layers = len(use_bn)
    h = x_ref[...].astype(jnp.float32)

    for i in range(n_layers):
        w = w_ref[i]                                          # (F, F) static index
        h = jnp.dot(h, w, preferred_element_type=jnp.float32)

        if use_bn[i]:
            g_row, b_row = vec_rows[i]
            gamma = vec_ref[pl.ds(g_row, 1), :]               # (1, F)
            beta = vec_ref[pl.ds(b_row, 1), :]                # (1, F)
            # Single-pass stats + folded scale/shift (2 full-(N,F) VPU ops).
            s = jnp.sum(h, axis=0, keepdims=True)
            ss = jnp.sum(h * h, axis=0, keepdims=True)
            mean = s * inv_n
            var = jnp.maximum(ss * inv_n - mean * mean, 0.0)  # biased train-mode var
            scale = gamma * jax.lax.rsqrt(var + BN_EPS)       # rsqrt -> EUP slot
            shift = beta - mean * scale
            h = h * scale + shift
        else:
            bias = vec_ref[pl.ds(vec_rows[i][0], 1), :]       # (1, F)
            h = h + bias

        if i < n_layers - 1:
            h = jnp.maximum(h, 0.0)                           # ReLU

    if use_sigmoid:
        h = jnp.tanh(0.5 * h)                                 # == 2*sigmoid(h) - 1

    out_ref[...] = h.astype(out_ref.dtype)


def _pack(x, params, use_bn):
    """Pad every feature dim to F_max and pack params into two slabs."""
    n_layers = len(params)
    dims = [x.shape[1]] + [p[0].shape[1] for p in params]
    f_max = max(dims)

    x_p = jnp.pad(x, ((0, 0), (0, f_max - x.shape[1])))

    w_slab = jnp.zeros((n_layers, f_max, f_max), jnp.float32)
    vec_list, rows, r = [], [], 0
    for i, p in enumerate(params):
        w_t, b = p[0], p[1]
        fi, fo = w_t.shape
        w_slab = w_slab.at[i, :fi, :fo].set(w_t)
        pad = ((0, 0), (0, f_max - fo))
        if use_bn[i]:
            gamma, beta = p[2], p[3]
            # bias elided: mean(h + b) - b == mean(h), BN cancels it exactly
            vec_list.append(jnp.pad(gamma, pad))
            vec_list.append(jnp.pad(beta, pad))
            rows.append((r, r + 1))
            r += 2
        else:
            vec_list.append(jnp.pad(b, pad))
            rows.append((r,))
            r += 1
    vec_slab = jnp.concatenate(vec_list, axis=0)
    pad_r = (-vec_slab.shape[0]) % 8                          # clean sublane tiling
    if pad_r:
        vec_slab = jnp.pad(vec_slab, ((0, pad_r), (0, 0)))
    return x_p, w_slab, vec_slab, tuple(rows), f_max


def net_forward(x, params, use_bn, use_sigmoid):
    """params: per layer (W_t (in,out), b (1,out)[, gamma (1,out), beta (1,out)])."""
    out_dim = params[-1][0].shape[1]
    n = x.shape[0]
    x_p, w_slab, vec_slab, rows, f_max = _pack(x, params, use_bn)

    kernel = functools.partial(
        _mlp_kernel, tuple(use_bn), use_sigmoid, rows, 1.0 / n)

    vmem = pl.BlockSpec(memory_space=pltpu.MemorySpace.VMEM)
    out = pl.pallas_call(
        kernel,
        out_shape=jax.ShapeDtypeStruct((n, f_max), x.dtype),
        in_specs=[vmem, vmem, vmem],
        out_specs=vmem,
    )(x_p, w_slab, vec_slab)
    return out[:, :out_dim]


def init_params(key, in_dim, mid_dim, out_dim, n_layers, bn_mode):
    sizes = [[mid_dim, mid_dim] for _ in range(n_layers)]
    sizes[0][0] = in_dim
    sizes[-1][-1] = out_dim
    if bn_mode == 'no':
        use_bn = [False] * n_layers
    elif bn_mode == 'all':
        use_bn = [True] * n_layers
    elif bn_mode == 'inside':
        use_bn = [True] * (n_layers - 1) + [False]
    else:
        raise ValueError('unknown bn_mode')

    params = []
    for i in range(n_layers):
        fan_in, fan_out = sizes[i]
        key, kw, kb = jax.random.split(key, 3)
        bound = 1.0 / jnp.sqrt(fan_in)
        # PyTorch Linear weight is (out, in); store transposed as (in, out).
        w_t = jax.random.uniform(kw, (fan_in, fan_out), jnp.float32, -bound, bound)
        b = jax.random.uniform(kb, (1, fan_out), jnp.float32, -bound, bound)
        layer = [w_t, b]
        if use_bn[i]:
            gamma = jnp.ones((1, fan_out), jnp.float32)   # BatchNorm1d init
            beta = jnp.zeros((1, fan_out), jnp.float32)
            layer.extend([gamma, beta])
        params.append(tuple(layer))
    return params, use_bn


def ref_forward(x, params, use_bn, use_sigmoid):
    """Pure-JAX reference following the original PyTorch module semantics."""
    h = x
    for i, p in enumerate(params):
        w_t, b = p[0], p[1]
        h = h @ w_t + b
        if use_bn[i]:
            gamma, beta = p[2], p[3]
            m = jnp.mean(h, axis=0, keepdims=True)
            v = jnp.mean((h - m) ** 2, axis=0, keepdims=True)
            h = (h - m) * jax.lax.rsqrt(v + BN_EPS) * gamma + beta
        if i < len(params) - 1:
            h = jnp.maximum(h, 0.0)
    if use_sigmoid:
        h = 2.0 * jax.nn.sigmoid(h) - 1.0
    return h


if __name__ == "__main__":
    in_dim, mid_dim, out_dim = 16, 32, 8
    n_layers = 3
    bn_mode = 'inside'
    use_sigmoid = True
    batch = 8

    key = jax.random.PRNGKey(0)
    key, kx = jax.random.split(key)
    x = jax.random.normal(kx, (batch, in_dim), jnp.float32)

    params, use_bn = init_params(key, in_dim, mid_dim, out_dim, n_layers, bn_mode)

    out = net_forward(x, params, use_bn, use_sigmoid)
    jax.block_until_ready(out)

    ref = ref_forward(x, params, use_bn, use_sigmoid)
    assert out.shape == (batch, out_dim)
    assert jnp.allclose(out, ref, atol=2e-5, rtol=1e-5)

    print("KERNEL_OK")
</pallas_src>

<mosaic_0001>
module attributes {stable_mosaic.version = 11 : i64} {
  func.func @_mlp_kernel(%arg0: memref<8x32xf32, #tpu.memory_space<vmem>>, %arg1: memref<3x32x32xf32, #tpu.memory_space<vmem>>, %arg2: memref<8x32xf32, #tpu.memory_space<vmem>>, %arg3: memref<8x32xf32, #tpu.memory_space<vmem>>) attributes {dimension_semantics = [], scalar_prefetch = 0 : i64, scratch_operands = 0 : i64, tpu.core_type = #tpu.core_type<tc>} {
    %c0 = arith.constant 0 : index
    %c0_0 = arith.constant 0 : index
    %0 = vector.load %arg0[%c0, %c0_0] : memref<8x32xf32, #tpu.memory_space<vmem>>, vector<8x32xf32>
    %c0_1 = arith.constant 0 : index
    %c0_2 = arith.constant 0 : index
    %c0_3 = arith.constant 0 : index
    %1 = vector.load %arg1[%c0_1, %c0_2, %c0_3] : memref<3x32x32xf32, #tpu.memory_space<vmem>>, vector<1x32x32xf32>
    %2 = vector.shape_cast %1 : vector<1x32x32xf32> to vector<32x32xf32>
    %cst = arith.constant dense<0.000000e+00> : vector<8x32xf32>
    %3 = tpu.matmul %0, %2, %cst {dimension_numbers = #tpu.dot_dimension_numbers<[1], [0], [0], [1], [0, 0, 1, 1], [], []>} : vector<8x32xf32>, vector<32x32xf32>, vector<8x32xf32> -> vector<8x32xf32>
    %c0_4 = arith.constant 0 : index
    %c0_5 = arith.constant 0 : index
    %4 = vector.load %arg2[%c0_4, %c0_5] : memref<8x32xf32, #tpu.memory_space<vmem>>, vector<1x32xf32>
    %c1 = arith.constant 1 : index
    %c0_6 = arith.constant 0 : index
    %5 = vector.load %arg2[%c1, %c0_6] : memref<8x32xf32, #tpu.memory_space<vmem>>, vector<1x32xf32>
    %cst_7 = arith.constant dense<0.000000e+00> : vector<32xf32>
    %6 = vector.multi_reduction <add>, %3, %cst_7 [0] : vector<8x32xf32> to vector<32xf32>
    %7 = vector.shape_cast %6 : vector<32xf32> to vector<1x32xf32>
    %8 = arith.mulf %3, %3 : vector<8x32xf32>
    %cst_8 = arith.constant dense<0.000000e+00> : vector<32xf32>
    %9 = vector.multi_reduction <add>, %8, %cst_8 [0] : vector<8x32xf32> to vector<32xf32>
    %10 = vector.shape_cast %9 : vector<32xf32> to vector<1x32xf32>
    %cst_9 = arith.constant 1.250000e-01 : f32
    %11 = vector.broadcast %cst_9 : f32 to vector<1x32xf32>
    %12 = arith.mulf %7, %11 : vector<1x32xf32>
    %cst_10 = arith.constant 1.250000e-01 : f32
    %13 = vector.broadcast %cst_10 : f32 to vector<1x32xf32>
    %14 = arith.mulf %10, %13 : vector<1x32xf32>
    %15 = arith.mulf %12, %12 : vector<1x32xf32>
    %16 = arith.subf %14, %15 : vector<1x32xf32>
    %cst_11 = arith.constant 0.000000e+00 : f32
    %17 = vector.broadcast %cst_11 : f32 to vector<1x32xf32>
    %18 = arith.maximumf %16, %17 : vector<1x32xf32>
    %cst_12 = arith.constant 9.99999974E-6 : f32
    %19 = vector.broadcast %cst_12 : f32 to vector<1x32xf32>
    %20 = arith.addf %18, %19 : vector<1x32xf32>
    %21 = math.rsqrt %20 : vector<1x32xf32>
    %22 = arith.mulf %4, %21 : vector<1x32xf32>
    %23 = arith.mulf %12, %22 : vector<1x32xf32>
    %24 = arith.subf %5, %23 : vector<1x32xf32>
    %25 = vector.broadcast %22 : vector<1x32xf32> to vector<8x32xf32>
    %26 = arith.mulf %3, %25 : vector<8x32xf32>
    %27 = vector.broadcast %24 : vector<1x32xf32> to vector<8x32xf32>
    %28 = arith.addf %26, %27 : vector<8x32xf32>
    %cst_13 = arith.constant 0.000000e+00 : f32
    %29 = vector.broadcast %cst_13 : f32 to vector<8x32xf32>
    %30 = arith.maximumf %28, %29 : vector<8x32xf32>
    %c1_14 = arith.constant 1 : index
    %c0_15 = arith.constant 0 : index
    %c0_16 = arith.constant 0 : index
    %31 = vector.load %arg1[%c1_14, %c0_15, %c0_16] : memref<3x32x32xf32, #tpu.memory_space<vmem>>, vector<1x32x32xf32>
    %32 = vector.shape_cast %31 : vector<1x32x32xf32> to vector<32x32xf32>
    %cst_17 = arith.constant dense<0.000000e+00> : vector<8x32xf32>
    %33 = tpu.matmul %30, %32, %cst_17 {dimension_numbers = #tpu.dot_dimension_numbers<[1], [0], [0], [1], [0, 0, 1, 1], [], []>} : vector<8x32xf32>, vector<32x32xf32>, vector<8x32xf32> -> vector<8x32xf32>
    %c2 = arith.constant 2 : index
    %c0_18 = arith.constant 0 : index
    %34 = vector.load %arg2[%c2, %c0_18] : memref<8x32xf32, #tpu.memory_space<vmem>>, vector<1x32xf32>
    %c3 = arith.constant 3 : index
    %c0_19 = arith.constant 0 : index
    %35 = vector.load %arg2[%c3, %c0_19] : memref<8x32xf32, #tpu.memory_space<vmem>>, vector<1x32xf32>
    %cst_20 = arith.constant dense<0.000000e+00> : vector<32xf32>
    %36 = vector.multi_reduction <add>, %33, %cst_20 [0] : vector<8x32xf32> to vector<32xf32>
    %37 = vector.shape_cast %36 : vector<32xf32> to vector<1x32xf32>
    %38 = arith.mulf %33, %33 : vector<8x32xf32>
    %cst_21 = arith.constant dense<0.000000e+00> : vector<32xf32>
    %39 = vector.multi_reduction <add>, %38, %cst_21 [0] : vector<8x32xf32> to vector<32xf32>
    %40 = vector.shape_cast %39 : vector<32xf32> to vector<1x32xf32>
    %cst_22 = arith.constant 1.250000e-01 : f32
    %41 = vector.broadcast %cst_22 : f32 to vector<1x32xf32>
    %42 = arith.mulf %37, %41 : vector<1x32xf32>
    %cst_23 = arith.constant 1.250000e-01 : f32
    %43 = vector.broadcast %cst_23 : f32 to vector<1x32xf32>
    %44 = arith.mulf %40, %43 : vector<1x32xf32>
    %45 = arith.mulf %42, %42 : vector<1x32xf32>
    %46 = arith.subf %44, %45 : vector<1x32xf32>
    %cst_24 = arith.constant 0.000000e+00 : f32
    %47 = vector.broadcast %cst_24 : f32 to vector<1x32xf32>
    %48 = arith.maximumf %46, %47 : vector<1x32xf32>
    %cst_25 = arith.constant 9.99999974E-6 : f32
    %49 = vector.broadcast %cst_25 : f32 to vector<1x32xf32>
    %50 = arith.addf %48, %49 : vector<1x32xf32>
    %51 = math.rsqrt %50 : vector<1x32xf32>
    %52 = arith.mulf %34, %51 : vector<1x32xf32>
    %53 = arith.mulf %42, %52 : vector<1x32xf32>
    %54 = arith.subf %35, %53 : vector<1x32xf32>
    %55 = vector.broadcast %52 : vector<1x32xf32> to vector<8x32xf32>
    %56 = arith.mulf %33, %55 : vector<8x32xf32>
    %57 = vector.broadcast %54 : vector<1x32xf32> to vector<8x32xf32>
    %58 = arith.addf %56, %57 : vector<8x32xf32>
    %cst_26 = arith.constant 0.000000e+00 : f32
    %59 = vector.broadcast %cst_26 : f32 to vector<8x32xf32>
    %60 = arith.maximumf %58, %59 : vector<8x32xf32>
    %c2_27 = arith.constant 2 : index
    %c0_28 = arith.constant 0 : index
    %c0_29 = arith.constant 0 : index
    %61 = vector.load %arg1[%c2_27, %c0_28, %c0_29] : memref<3x32x32xf32, #tpu.memory_space<vmem>>, vector<1x32x32xf32>
    %62 = vector.shape_cast %61 : vector<1x32x32xf32> to vector<32x32xf32>
    %cst_30 = arith.constant dense<0.000000e+00> : vector<8x32xf32>
    %63 = tpu.matmul %60, %62, %cst_30 {dimension_numbers = #tpu.dot_dimension_numbers<[1], [0], [0], [1], [0, 0, 1, 1], [], []>} : vector<8x32xf32>, vector<32x32xf32>, vector<8x32xf32> -> vector<8x32xf32>
    %c4 = arith.constant 4 : index
    %c0_31 = arith.constant 0 : index
    %64 = vector.load %arg2[%c4, %c0_31] : memref<8x32xf32, #tpu.memory_space<vmem>>, vector<1x32xf32>
    %65 = vector.broadcast %64 : vector<1x32xf32> to vector<8x32xf32>
    %66 = arith.addf %63, %65 : vector<8x32xf32>
    %cst_32 = arith.constant 5.000000e-01 : f32
    %67 = vector.broadcast %cst_32 : f32 to vector<8x32xf32>
    %68 = arith.mulf %67, %66 : vector<8x32xf32>
    %69 = math.tanh %68 : vector<8x32xf32>
    %c0_33 = arith.constant 0 : index
    %c0_34 = arith.constant 0 : index
    %70 = vector.load %arg3[%c0_33, %c0_34] : memref<8x32xf32, #tpu.memory_space<vmem>>, vector<8x32xf32>
    tpu.vector_store %arg3[%c0_33, %c0_34], %69 {strides = array<i32>} : memref<8x32xf32, #tpu.memory_space<vmem>>, vector<8x32xf32>,
    return
  }
}

</mosaic_0001>

<llo_original>
// kernel: tpu_custom_call.1
$region0: #{tpu_custom_call.1}
  #allocation0 [shape = 'u32[]', space=smem, size = 0x4, offset = 0x4, fixed_abs, tag = 'smem constant byte address 0x4 - core index']
  #allocation1 [shape = 'u32[144,128]{1,0:T(1,128)}', space=vmem, size = 0x12000, scoped, tag = 'internal scratch']
  %s0 = inlined_call_operand.hbm [shape: f32[8,32], index: 0, kind: input, shape index: {}]
  %s1 = inlined_call_operand.hbm [shape: f32[3,32,32], index: 1, kind: input, shape index: {}]
  %s2 = inlined_call_operand.hbm [shape: f32[8,32], index: 2, kind: input, shape index: {}]
  %s3 = inlined_call_operand.hbm [shape: f32[8,32], index: 3, kind: output, shape index: {}]
  %s4 = sld [smem:[#allocation0]]
  $region34: #{tpu_custom_call.1} parent=0
    _
  %s6 = ssub.s32 1, %s4
  %s7 = scalar_select 0, %s6, %s4
  $region1: #{tpu_custom_call.1} parent=0
    #allocation2 [shape = 'u8[4096]{0}', space=vmem, size = 0x1000, scoped, tag = 'input window, operand 0, single buffered']
    #allocation3 [shape = 's32[1]{0}', space=sflag, size = 0x4, scoped, tag = 'scoped memory for tpu_custom_call.1']
    #allocation4 [shape = 's32[1]{0}', space=sflag, size = 0x4, scoped, tag = 'scoped memory for tpu_custom_call.1']
    #allocation5 [shape = 'u8[49152]{0}', space=vmem, size = 0xc000, scoped, tag = 'input window, operand 1, single buffered']
    #allocation6 [shape = 's32[1]{0}', space=sflag, size = 0x4, scoped, tag = 'scoped memory for tpu_custom_call.1']
    #allocation7 [shape = 'u8[4096]{0}', space=vmem, size = 0x1000, scoped, tag = 'input window, operand 2, single buffered']
    #allocation8 [shape = 'u8[4096]{0}', space=vmem, size = 0x1000, scoped, tag = 'output window, operand 0, single buffered']
    %8 = vsyncpa [#allocation3], 0
    %9 = vsyncpa [#allocation6], 0
    %10 = vsyncpa [#allocation4], 0
    // Predicated region
    $region2: #{tpu_custom_call.1} parent=1 // pred_check
      _
    $region3: #{tpu_custom_call.1} parent=1 // pred_check_branch
      %12 = sbr.rel (0) target = $region5
    $region4: #{tpu_custom_call.1} parent=1 // pred_region
      %s14 = ssub.s32 128, 128
      %15 = vsyncadd [#allocation3], %s14
      %s17 = sshll.u32 [#allocation2], 4
      %s18 = int_to_ptr.vmem [resolvable:$true] %s17
      %20 = dma.hbm_to_vmem [thread:$0]  %s0, 128, %s18, [#allocation3]
    $region5: #{tpu_custom_call.1} parent=1 // pred_fallthru
      _
    // Predicated region
    $region6: #{tpu_custom_call.1} parent=1 // pred_check
      _
    $region7: #{tpu_custom_call.1} parent=1 // pred_check_branch
      %22 = sbr.rel (0) target = $region9
    $region8: #{tpu_custom_call.1} parent=1 // pred_region
      %s24 = ssub.s32 1536, 1536
      %25 = vsyncadd [#allocation6], %s24
      %s26 = sshll.u32 [#allocation5], 4
      %s27 = int_to_ptr.vmem [resolvable:$true] %s26
      %32 = dma.hbm_to_vmem [thread:$0]  %s1, 1536, %s27, [#allocation6], 128, 128, 8
    $region9: #{tpu_custom_call.1} parent=1 // pred_fallthru
      _
    // Predicated region
    $region10: #{tpu_custom_call.1} parent=1 // pred_check
      _
    $region11: #{tpu_custom_call.1} parent=1 // pred_check_branch
      %34 = sbr.rel (0) target = $region13
    $region12: #{tpu_custom_call.1} parent=1 // pred_region
      %s36 = ssub.s32 128, 128
      %37 = vsyncadd [#allocation6], %s36
      %s39 = sshll.u32 [#allocation7], 4
      %s40 = int_to_ptr.vmem [resolvable:$true] %s39
      %42 = dma.hbm_to_vmem [thread:$0]  %s2, 128, %s40, [#allocation6]
    $region13: #{tpu_custom_call.1} parent=1 // pred_fallthru
      _
    // Predicated region
    $region14: #{tpu_custom_call.1} parent=1 // pred_check
      _
    $region15: #{tpu_custom_call.1} parent=1 // pred_check_branch
      %44 = sbr.rel (0) target = $region17
    $region16: #{tpu_custom_call.1} parent=1 // pred_region
      %45 = dma.done [#allocation3], 128
    $region17: #{tpu_custom_call.1} parent=1 // pred_fallthru
      _
    // Predicated region
    $region18: #{tpu_custom_call.1} parent=1 // pred_check
      _
    $region19: #{tpu_custom_call.1} parent=1 // pred_check_branch
      %47 = sbr.rel (0) target = $region21
    $region20: #{tpu_custom_call.1} parent=1 // pred_region
      %48 = dma.done [#allocation6], 1536
    $region21: #{tpu_custom_call.1} parent=1 // pred_fallthru
      _
    // Predicated region
    $region22: #{tpu_custom_call.1} parent=1 // pred_check
      _
    $region23: #{tpu_custom_call.1} parent=1 // pred_check_branch
      %50 = sbr.rel (0) target = $region25
    $region24: #{tpu_custom_call.1} parent=1 // pred_region
      %51 = dma.done [#allocation6], 128
    $region25: #{tpu_custom_call.1} parent=1 // pred_fallthru
      _
    %v52 = vld [vmem:[#allocation2] sm:$0xff]
    %v53 = vld [vmem:[#allocation5] sm:$0xff]
    %v54 = vld [vmem:[#allocation5 + $0x8] sm:$0xff]
    %v55 = vld [vmem:[#allocation5 + $0x10] sm:$0xff]
    %v56 = vld [vmem:[#allocation5 + $0x18] sm:$0xff]
    %vm57 = vcmask 261120
    %v59 = vsel %vm57, %v52, 0
    %61 = vmatprep.subr.mxu0 0.0
    %62 = vmatpush1.msra.mxu0 %v53
    %63 = vmatprep.subr.mxu0 0.0
    %64 = vmatpush1.msra.mxu0 %v54
    %65 = vmatprep.subr.mxu0 0.0
    %66 = vmatpush1.msra.mxu0 %v55
    %67 = vmatprep.subr.mxu0 0.0
    %68 = vmatpush1.msra.mxu0 %v56
    %69 = vmatprep.subr.mxu0 0.0
    %70 = vmatpush1.msra.mxu0 0.0
    %71 = vmatprep.subr.mxu0 0.0
    %72 = vmatpush1.msra.mxu0 0.0
    %73 = vmatprep.subr.mxu0 0.0
    %74 = vmatpush1.msra.mxu0 0.0
    %75 = vmatprep.subr.mxu0 0.0
    %76 = vmatpush1.msra.mxu0 0.0
    %77 = vmatprep.subr.mxu0 0.0
    %78 = vmatpush1.msra.mxu0 0.0
    %79 = vmatprep.subr.mxu0 0.0
    %80 = vmatpush1.msra.mxu0 0.0
    %81 = vmatprep.subr.mxu0 0.0
    %82 = vmatpush1.msra.mxu0 0.0
    %83 = vmatprep.subr.mxu0 0.0
    %84 = vmatpush1.msra.mxu0 0.0
    %85 = vmatprep.subr.mxu0 0.0
    %86 = vmatpush1.msra.mxu0 0.0
    %87 = vmatprep.subr.mxu0 0.0
    %88 = vmatpush1.msra.mxu0 0.0
    %89 = vmatprep.subr.mxu0 0.0
    %90 = vmatpush1.msra.mxu0 0.0
    %91 = vmatprep.subr.mxu0 0.0
    %92 = vmatpush1.msra.mxu0 0.0
    %93 = vmatprep.subr.mxu0 0.0
    %94 = vmatpush1.msra.mxu0 0.0
    %95 = vmatprep.subr.mxu0 0.0
    %96 = vmatpush1.msra.mxu0 0.0
    %97 = vmatprep.subr.mxu0 0.0
    %98 = vmatpush1.msra.mxu0 0.0
    %99 = vmatprep.subr.mxu0 0.0
    %100 = vmatpush1.msra.mxu0 0.0
    %101 = vmatprep.subr.mxu0 0.0
    %102 = vmatpush1.msra.mxu0 0.0
    %103 = vmatprep.subr.mxu0 0.0
    %104 = vmatpush1.msra.mxu0 0.0
    %105 = vmatprep.subr.mxu0 0.0
    %106 = vmatpush1.msra.mxu0 0.0
    %107 = vmatprep.subr.mxu0 0.0
    %108 = vmatpush1.msra.mxu0 0.0
    %109 = vmatprep.subr.mxu0 0.0
    %110 = vmatpush1.msra.mxu0 0.0
    %111 = vmatprep.subr.mxu0 0.0
    %112 = vmatpush1.msra.mxu0 0.0
    %113 = vmatprep.subr.mxu0 0.0
    %114 = vmatpush1.msra.mxu0 0.0
    %115 = vmatprep.subr.mxu0 0.0
    %116 = vmatpush1.msra.mxu0 0.0
    %117 = vmatprep.subr.mxu0 0.0
    %118 = vmatpush1.msra.mxu0 0.0
    %119 = vmatprep.subr.mxu0 0.0
    %120 = vmatpush1.msra.mxu0 0.0
    %121 = vmatprep.subr.mxu0 0.0
    %122 = vmatpush1.msra.mxu0 0.0
    %123 = vmatprep.subr.mxu0 0.0
    %124 = vmatpush1.msra.mxu0 0.0
    %125 = vmatprep.mubr.f32.mxu0 0.0
    %126 = vmatmul.mubr.f32.gmra.mrb[0].mxu0 %v59
    %v127 = vpop.f32.mrb[0].mxu0
    %v128 = vadd.f32 0.0, %v127
    %v129 = vpop.f32.mrb[0].mxu0
    %130 = vdwg.mxu0
    %v131 = vld [vmem:[#allocation7] sm:$0x1]
    %v132 = vld [vmem:[#allocation7 + $0x1] sm:$0x1]
    %v133 = vsel %vm57, %v128, 0.0
    %v134 = vrot.slane %v133, 4
    %v135 = vadd.f32 %v133, %v134
    %v136 = vrot.slane %v135, 2
    %v137 = vadd.f32 %v135, %v136
    %v138 = vrot.slane %v137, 1
    %v139 = vadd.f32 %v137, %v138
    %v140 = vmul.f32 %v128, %v128
    %v141 = vsel %vm57, %v140, 0.0
    %v142 = vrot.slane %v141, 4
    %v143 = vadd.f32 %v141, %v142
    %v144 = vrot.slane %v143, 2
    %v145 = vadd.f32 %v143, %v144
    %v146 = vrot.slane %v145, 1
    %v147 = vadd.f32 %v145, %v146
    %v148 = vmul.f32 %v139, 0.125
    %v149 = vmul.f32 %v147, 0.125
    %v150 = vmul.f32 %v148, %v148
    %v151 = vsub.f32 %v149, %v150
    %v152 = vmax.f32 %v151, 0.0
    %v153 = vadd.f32 %v152, 1e-05
    %v154 = vrsqrt.pop %v153
    %v155 = vmul.f32 %v131, %v154
    %v156 = vmul.f32 %v148, %v155
    %v157 = vsub.f32 %v132, %v156
    %v158 = vlaneseq
    %v159 = vshrl.u32 %v158, 7
    %v160 = vsub.s32 0, %v159
    %v161 = vrot.slane %v155, %v160
    %v162 = vmul.f32 %v128, %v161
    %v163 = vlaneseq
    %v164 = vshrl.u32 %v163, 7
    %v165 = vsub.s32 0, %v164
    %v166 = vrot.slane %v157, %v165
    %v167 = vadd.f32 %v162, %v166
    %v168 = vmax.f32 %v167, 0.0
    %s169 = scalar_lea.vmem [#allocation5], 32
    %v170 = vld [vmem:[%s169] sm:$0xff]
    %v171 = vld [vmem:[%s169 + $0x8] sm:$0xff]
    %v172 = vld [vmem:[%s169 + $0x10] sm:$0xff]
    %v173 = vld [vmem:[%s169 + $0x18] sm:$0xff]
    %v175 = vsel %vm57, %v168, 0
    %177 = vmatprep.subr.mxu0 0.0
    %178 = vmatpush1.msra.mxu0 %v170
    %179 = vmatprep.subr.mxu0 0.0
    %180 = vmatpush1.msra.mxu0 %v171
    %181 = vmatprep.subr.mxu0 0.0
    %182 = vmatpush1.msra.mxu0 %v172
    %183 = vmatprep.subr.mxu0 0.0
    %184 = vmatpush1.msra.mxu0 %v173
    %185 = vmatprep.subr.mxu0 0.0
    %186 = vmatpush1.msra.mxu0 0.0
    %187 = vmatprep.subr.mxu0 0.0
    %188 = vmatpush1.msra.mxu0 0.0
    %189 = vmatprep.subr.mxu0 0.0
    %190 = vmatpush1.msra.mxu0 0.0
    %191 = vmatprep.subr.mxu0 0.0
    %192 = vmatpush1.msra.mxu0 0.0
    %193 = vmatprep.subr.mxu0 0.0
    %194 = vmatpush1.msra.mxu0 0.0
    %195 = vmatprep.subr.mxu0 0.0
    %196 = vmatpush1.msra.mxu0 0.0
    %197 = vmatprep.subr.mxu0 0.0
    %198 = vmatpush1.msra.mxu0 0.0
    %199 = vmatprep.subr.mxu0 0.0
    %200 = vmatpush1.msra.mxu0 0.0
    %201 = vmatprep.subr.mxu0 0.0
    %202 = vmatpush1.msra.mxu0 0.0
    %203 = vmatprep.subr.mxu0 0.0
    %204 = vmatpush1.msra.mxu0 0.0
    %205 = vmatprep.subr.mxu0 0.0
    %206 = vmatpush1.msra.mxu0 0.0
    %207 = vmatprep.subr.mxu0 0.0
    %208 = vmatpush1.msra.mxu0 0.0
    %209 = vmatprep.subr.mxu0 0.0
    %210 = vmatpush1.msra.mxu0 0.0
    %211 = vmatprep.subr.mxu0 0.0
    %212 = vmatpush1.msra.mxu0 0.0
    %213 = vmatprep.subr.mxu0 0.0
    %214 = vmatpush1.msra.mxu0 0.0
    %215 = vmatprep.subr.mxu0 0.0
    %216 = vmatpush1.msra.mxu0 0.0
    %217 = vmatprep.subr.mxu0 0.0
    %218 = vmatpush1.msra.mxu0 0.0
    %219 = vmatprep.subr.mxu0 0.0
    %220 = vmatpush1.msra.mxu0 0.0
    %221 = vmatprep.subr.mxu0 0.0
    %222 = vmatpush1.msra.mxu0 0.0
    %223 = vmatprep.subr.mxu0 0.0
    %224 = vmatpush1.msra.mxu0 0.0
    %225 = vmatprep.subr.mxu0 0.0
    %226 = vmatpush1.msra.mxu0 0.0
    %227 = vmatprep.subr.mxu0 0.0
    %228 = vmatpush1.msra.mxu0 0.0
    %229 = vmatprep.subr.mxu0 0.0
    %230 = vmatpush1.msra.mxu0 0.0
    %231 = vmatprep.subr.mxu0 0.0
    %232 = vmatpush1.msra.mxu0 0.0
    %233 = vmatprep.subr.mxu0 0.0
    %234 = vmatpush1.msra.mxu0 0.0
    %235 = vmatprep.subr.mxu0 0.0
    %236 = vmatpush1.msra.mxu0 0.0
    %237 = vmatprep.subr.mxu0 0.0
    %238 = vmatpush1.msra.mxu0 0.0
    %239 = vmatprep.subr.mxu0 0.0
    %240 = vmatpush1.msra.mxu0 0.0
    %241 = vmatprep.mubr.f32.mxu0 0.0
    %242 = vmatmul.mubr.f32.gmra.mrb[0].mxu0 %v175
    %v243 = vpop.f32.mrb[0].mxu0
    %v244 = vadd.f32 0.0, %v243
    %v245 = vpop.f32.mrb[0].mxu0
    %246 = vdwg.mxu0
    %v247 = vld [vmem:[#allocation7 + $0x2] sm:$0x1]
    %v248 = vld [vmem:[#allocation7 + $0x3] sm:$0x1]
    %v249 = vsel %vm57, %v244, 0.0
    %v250 = vrot.slane %v249, 4
    %v251 = vadd.f32 %v249, %v250
    %v252 = vrot.slane %v251, 2
    %v253 = vadd.f32 %v251, %v252
    %v254 = vrot.slane %v253, 1
    %v255 = vadd.f32 %v253, %v254
    %v256 = vmul.f32 %v244, %v244
    %v257 = vsel %vm57, %v256, 0.0
    %v258 = vrot.slane %v257, 4
    %v259 = vadd.f32 %v257, %v258
    %v260 = vrot.slane %v259, 2
    %v261 = vadd.f32 %v259, %v260
    %v262 = vrot.slane %v261, 1
    %v263 = vadd.f32 %v261, %v262
    %v264 = vmul.f32 %v255, 0.125
    %v265 = vmul.f32 %v263, 0.125
    %v266 = vmul.f32 %v264, %v264
    %v267 = vsub.f32 %v265, %v266
    %v268 = vmax.f32 %v267, 0.0
    %v269 = vadd.f32 %v268, 1e-05
    %v270 = vrsqrt.pop %v269
    %v271 = vmul.f32 %v247, %v270
    %v272 = vmul.f32 %v264, %v271
    %v273 = vsub.f32 %v248, %v272
    %v274 = vlaneseq
    %v275 = vshrl.u32 %v274, 7
    %v276 = vsub.s32 0, %v275
    %v277 = vrot.slane %v271, %v276
    %v278 = vmul.f32 %v244, %v277
    %v279 = vlaneseq
    %v280 = vshrl.u32 %v279, 7
    %v281 = vsub.s32 0, %v280
    %v282 = vrot.slane %v273, %v281
    %v283 = vadd.f32 %v278, %v282
    %v284 = vmax.f32 %v283, 0.0
    %s285 = scalar_lea.vmem [#allocation5], 64
    %v286 = vld [vmem:[%s285] sm:$0xff]
    %v287 = vld [vmem:[%s285 + $0x8] sm:$0xff]
    %v288 = vld [vmem:[%s285 + $0x10] sm:$0xff]
    %v289 = vld [vmem:[%s285 + $0x18] sm:$0xff]
    %v290 = vld [vmem:[#allocation7 + $0x4] sm:$0x1]
    %v291 = vlaneseq
    %v292 = vshrl.u32 %v291, 7
    %v293 = vsub.s32 0, %v292
    %v294 = vrot.slane %v290, %v293
    %v296 = vsel %vm57, %v284, 0
    %298 = vmatprep.subr.mxu0 0.0
    %299 = vmatpush1.msra.mxu0 %v286
    %300 = vmatprep.subr.mxu0 0.0
    %301 = vmatpush1.msra.mxu0 %v287
    %302 = vmatprep.subr.mxu0 0.0
    %303 = vmatpush1.msra.mxu0 %v288
    %304 = vmatprep.subr.mxu0 0.0
    %305 = vmatpush1.msra.mxu0 %v289
    %306 = vmatprep.subr.mxu0 0.0
    %307 = vmatpush1.msra.mxu0 0.0
    %308 = vmatprep.subr.mxu0 0.0
    %309 = vmatpush1.msra.mxu0 0.0
    %310 = vmatprep.subr.mxu0 0.0
    %311 = vmatpush1.msra.mxu0 0.0
    %312 = vmatprep.subr.mxu0 0.0
    %313 = vmatpush1.msra.mxu0 0.0
    %314 = vmatprep.subr.mxu0 0.0
    %315 = vmatpush1.msra.mxu0 0.0
    %316 = vmatprep.subr.mxu0 0.0
    %317 = vmatpush1.msra.mxu0 0.0
    %318 = vmatprep.subr.mxu0 0.0
    %319 = vmatpush1.msra.mxu0 0.0
    %320 = vmatprep.subr.mxu0 0.0
    %321 = vmatpush1.msra.mxu0 0.0
    %322 = vmatprep.subr.mxu0 0.0
    %323 = vmatpush1.msra.mxu0 0.0
    %324 = vmatprep.subr.mxu0 0.0
    %325 = vmatpush1.msra.mxu0 0.0
    %326 = vmatprep.subr.mxu0 0.0
    %327 = vmatpush1.msra.mxu0 0.0
    %328 = vmatprep.subr.mxu0 0.0
    %329 = vmatpush1.msra.mxu0 0.0
    %330 = vmatprep.subr.mxu0 0.0
    %331 = vmatpush1.msra.mxu0 0.0
    %332 = vmatprep.subr.mxu0 0.0
    %333 = vmatpush1.msra.mxu0 0.0
    %334 = vmatprep.subr.mxu0 0.0
    %335 = vmatpush1.msra.mxu0 0.0
    %336 = vmatprep.subr.mxu0 0.0
    %337 = vmatpush1.msra.mxu0 0.0
    %338 = vmatprep.subr.mxu0 0.0
    %339 = vmatpush1.msra.mxu0 0.0
    %340 = vmatprep.subr.mxu0 0.0
    %341 = vmatpush1.msra.mxu0 0.0
    %342 = vmatprep.subr.mxu0 0.0
    %343 = vmatpush1.msra.mxu0 0.0
    %344 = vmatprep.subr.mxu0 0.0
    %345 = vmatpush1.msra.mxu0 0.0
    %346 = vmatprep.subr.mxu0 0.0
    %347 = vmatpush1.msra.mxu0 0.0
    %348 = vmatprep.subr.mxu0 0.0
    %349 = vmatpush1.msra.mxu0 0.0
    %350 = vmatprep.subr.mxu0 0.0
    %351 = vmatpush1.msra.mxu0 0.0
    %352 = vmatprep.subr.mxu0 0.0
    %353 = vmatpush1.msra.mxu0 0.0
    %354 = vmatprep.subr.mxu0 0.0
    %355 = vmatpush1.msra.mxu0 0.0
    %356 = vmatprep.subr.mxu0 0.0
    %357 = vmatpush1.msra.mxu0 0.0
    %358 = vmatprep.subr.mxu0 0.0
    %359 = vmatpush1.msra.mxu0 0.0
    %360 = vmatprep.subr.mxu0 0.0
    %361 = vmatpush1.msra.mxu0 0.0
    %362 = vmatprep.mubr.f32.mxu0 0.0
    %363 = vmatmul.mubr.f32.gmra.mrb[0].mxu0 %v296
    %v364 = vpop.f32.mrb[0].mxu0
    %v365 = vadd.f32 %v294, %v364
    %v366 = vpop.f32.mrb[0].mxu0
    %367 = vdwg.mxu0
    %v368 = vmul.f32 %v365, 0.5
    %v369 = vtanh.pop %v368
    %370 = vst.msk [vmem:[#allocation8] sm:$0xff] %vm57, %v369
    // Predicated region
    $region26: #{tpu_custom_call.1} parent=1 // pred_check
      _
    $region27: #{tpu_custom_call.1} parent=1 // pred_check_branch
      %372 = sbr.rel (0) target = $region29
    $region28: #{tpu_custom_call.1} parent=1 // pred_region
      %s374 = ssub.s32 128, 128
      %375 = vsyncadd [#allocation4], %s374
      %s377 = sshll.u32 [#allocation8], 4
      %s378 = int_to_ptr.vmem [resolvable:$true] %s377
      %380 = dma.vmem_to_hbm [thread:$0]  %s378, 128, %s3, [#allocation4]
    $region29: #{tpu_custom_call.1} parent=1 // pred_fallthru
      _
    // Predicated region
    $region30: #{tpu_custom_call.1} parent=1 // pred_check
      _
    $region31: #{tpu_custom_call.1} parent=1 // pred_check_branch
      %382 = sbr.rel (0) target = $region33
    $region32: #{tpu_custom_call.1} parent=1 // pred_region
      %383 = dma.done [#allocation4], 128
    $region33: #{tpu_custom_call.1} parent=1 // pred_fallthru
      _
    %384 = vsyncpa [#allocation3], 1
    %385 = vsyncpa [#allocation6], 1
    %386 = vsyncpa [#allocation4], 1

</llo_original>
